<compile_context>
chip_gen: v7x
topology: tpu7x:2x2x1
jax: 0.10.0
libtpu: 0.0.40
codegen_flags: <defaults>
</compile_context>

<pallas_src>
import jax
import jax.numpy as jnp
from jax.experimental import pallas as pl
from jax.experimental.pallas import tpu as pltpu


def _round_up(a: int, b: int) -> int:
    return ((a + b - 1) // b) * b


def _one_hot_kernel(x_ref, o_ref):
    # x_ref: (tile_n, 1) int32 indices; o_ref: (tile_n, tile_c) float32 one-hot slab.
    idx = x_ref[...]                                          # (tile_n, 1)
    tn, tc = o_ref.shape
    # Class ids covered by this (i, j) block: [j*tile_c, j*tile_c + tile_c).
    class_off = pl.program_id(1) * tc
    classes = jax.lax.broadcasted_iota(jnp.int32, (tn, tc), 1) + class_off
    # Broadcast compare along lanes (VPU), cast bool -> f32.
    o_ref[...] = (classes == idx).astype(jnp.float32)


def one_hot(x, num_classes: int):
    """Pallas equivalent of F.one_hot(x, num_classes).float()."""
    orig_shape = x.shape
    flat = x.reshape(-1).astype(jnp.int32)
    n = flat.shape[0]
    flat = flat.reshape(n, 1)

    # ---- Tile selection (store-bound: big, lane-aware output blocks). ----
    # Class tiling: full class axis when small (single store block); otherwise
    # 512-wide chunks (multiple of 128 -> lane-dense, unmasked stores).
    tile_c = num_classes if num_classes <= 1024 else 512
    padded_c = _round_up(tile_c, 128)          # VMEM lane padding of the block

    # Row tiling: target ~2 MiB lane-padded f32 output block, clamp to [512, 8192],
    # keep it a multiple of 8 (sublane constraint), never (much) exceed the array.
    tile_n = (2 << 20) // (4 * padded_c)
    tile_n = max(512, min(tile_n, 8192))
    tile_n = (tile_n // 8) * 8
    tile_n = min(tile_n, _round_up(n, 8))
    tile_n = max(tile_n, 8)

    grid = (pl.cdiv(n, tile_n), pl.cdiv(num_classes, tile_c))

    # VMEM budget: double-buffered lane-padded output + input blocks + headroom.
    out_block_bytes = tile_n * padded_c * 4
    in_block_bytes = tile_n * 128 * 4          # (tile_n, 1) int32 lane-pads to 128
    vmem_need = 2 * (out_block_bytes + in_block_bytes) + (2 << 20)
    vmem_limit = min(max(vmem_need, 8 << 20), 32 << 20)

    out = pl.pallas_call(
        _one_hot_kernel,
        out_shape=jax.ShapeDtypeStruct((n, num_classes), jnp.float32),
        grid_spec=pltpu.PrefetchScalarGridSpec(
            num_scalar_prefetch=0,
            grid=grid,
            in_specs=[pl.BlockSpec((tile_n, 1), lambda i, j: (i, 0))],
            out_specs=pl.BlockSpec((tile_n, tile_c), lambda i, j: (i, j)),
        ),
        compiler_params=pltpu.CompilerParams(
            dimension_semantics=("parallel", "parallel"),
            vmem_limit_bytes=vmem_limit,
        ),
    )(flat)

    return out.reshape(*orig_shape, num_classes)


if __name__ == "__main__":
    key = jax.random.PRNGKey(0)

    # Case 1: small label tensor, small class count (single class block, ragged rows).
    num_classes = 10
    x = jax.random.randint(key, (2, 8, 16), minval=0, maxval=num_classes,
                           dtype=jnp.int32)
    y = jax.block_until_ready(one_hot(x, num_classes))
    ref = jax.nn.one_hot(x, num_classes, dtype=jnp.float32)
    assert y.shape == ref.shape, (y.shape, ref.shape)
    assert y.dtype == jnp.float32
    assert bool(jnp.all(y == ref))

    # Case 2: vocab-scale class count exercising the 2D (N, C) grid / tile_c path.
    num_classes2 = 2048
    x2 = jax.random.randint(jax.random.PRNGKey(1), (4, 16), minval=0,
                            maxval=num_classes2, dtype=jnp.int32)
    y2 = jax.block_until_ready(one_hot(x2, num_classes2))
    ref2 = jax.nn.one_hot(x2, num_classes2, dtype=jnp.float32)
    assert y2.shape == ref2.shape, (y2.shape, ref2.shape)
    assert bool(jnp.all(y2 == ref2))

    print("KERNEL_OK")
</pallas_src>

<mosaic_0001>
module attributes {stable_mosaic.version = 11 : i64} {
  func.func @_one_hot_kernel(%arg0: i32, %arg1: i32, %arg2: memref<256x1xi32, #tpu.memory_space<vmem>>, %arg3: memref<256x10xf32, #tpu.memory_space<vmem>>) attributes {dimension_semantics = [#tpu.dimension_semantics<parallel>, #tpu.dimension_semantics<parallel>], iteration_bounds = array<i64: 1, 1>, scalar_prefetch = 0 : i64, scratch_operands = 0 : i64, tpu.core_type = #tpu.core_type<tc>, window_params = [{transform_indices = @transform_0, window_bounds = array<i64: 256, 1>}, {transform_indices = @transform_1, window_bounds = array<i64: 256, 10>}]} {
    %c0 = arith.constant 0 : index
    %c0_0 = arith.constant 0 : index
    %0 = vector.load %arg2[%c0, %c0_0] : memref<256x1xi32, #tpu.memory_space<vmem>>, vector<256x1xi32>
    %c10_i32 = arith.constant 10 : i32
    %1 = arith.muli %arg1, %c10_i32 : i32
    %2 = tpu.iota {dimensions = array<i32: 1>} : vector<256x10xi32>
    %3 = vector.broadcast %1 : i32 to vector<256x10xi32>
    %4 = arith.addi %2, %3 : vector<256x10xi32>
    %5 = vector.broadcast %0 : vector<256x1xi32> to vector<256x10xi32>
    %6 = arith.cmpi eq, %4, %5 : vector<256x10xi32>
    %7 = arith.extui %6 : vector<256x10xi1> to vector<256x10xi32>
    %8 = arith.sitofp %7 : vector<256x10xi32> to vector<256x10xf32>
    %c0_1 = arith.constant 0 : index
    %c0_2 = arith.constant 0 : index
    %9 = vector.load %arg3[%c0_1, %c0_2] : memref<256x10xf32, #tpu.memory_space<vmem>>, vector<256x10xf32>
    tpu.vector_store %arg3[%c0_1, %c0_2], %8 {strides = array<i32>} : memref<256x10xf32, #tpu.memory_space<vmem>>, vector<256x10xf32>,
    return
  }
  func.func @transform_0(%arg0: i32, %arg1: i32) -> (i32, i32) {
    %c0_i32 = arith.constant 0 : i32
    %c0_i32_0 = arith.constant 0 : i32
    return %arg0, %c0_i32 : i32, i32
  }
  func.func @transform_1(%arg0: i32, %arg1: i32) -> (i32, i32) {
    %c0_i32 = arith.constant 0 : i32
    return %arg0, %arg1 : i32, i32
  }
}

</mosaic_0001>

<llo_original>
// kernel: tpu_custom_call.1
$region0: #{tpu_custom_call.1}
  #allocation0 [shape = 'u32[]', space=smem, size = 0x4, offset = 0x4, fixed_abs, tag = 'smem constant byte address 0x4 - core index']
  #allocation1 [shape = 'u32[144,128]{1,0:T(1,128)}', space=vmem, size = 0x12000, scoped, tag = 'internal scratch']
  %s0 = inlined_call_operand.vmem [shape: s32[256,1], index: 0, kind: input, shape index: {}]
  %s1 = inlined_call_operand.vmem [shape: f32[256,10], index: 1, kind: output, shape index: {}]
  %s2 = sld [smem:[#allocation0]]
  $region14: #{tpu_custom_call.1} parent=0
    _
  %s4 = ssub.s32 1, %s2
  %s5 = scalar_select 0, %s4, %s2
  // Predicated region
  $region2: #{tpu_custom_call.1} parent=0 // pred_check
    _
  $region3: #{tpu_custom_call.1} parent=0 // pred_check_branch
    %7 = sbr.rel (0) target = $region5
  $region4: #{tpu_custom_call.1} parent=0 // pred_region
    _
  $region5: #{tpu_custom_call.1} parent=0 // pred_fallthru
    _
  %v8 = vld [vmem:[%s0] sm:$0xff]
  %v9 = vld [vmem:[%s0 + $0x8] sm:$0xff]
  %v10 = vld [vmem:[%s0 + $0x10] sm:$0xff]
  %v11 = vld [vmem:[%s0 + $0x18] sm:$0xff]
  %v12 = vld [vmem:[%s0 + $0x20] sm:$0xff]
  %v13 = vld [vmem:[%s0 + $0x28] sm:$0xff]
  %v14 = vld [vmem:[%s0 + $0x30] sm:$0xff]
  %v15 = vld [vmem:[%s0 + $0x38] sm:$0xff]
  %v16 = vld [vmem:[%s0 + $0x40] sm:$0xff]
  %v17 = vld [vmem:[%s0 + $0x48] sm:$0xff]
  %v18 = vld [vmem:[%s0 + $0x50] sm:$0xff]
  %v19 = vld [vmem:[%s0 + $0x58] sm:$0xff]
  %v20 = vld [vmem:[%s0 + $0x60] sm:$0xff]
  %v21 = vld [vmem:[%s0 + $0x68] sm:$0xff]
  %v22 = vld [vmem:[%s0 + $0x70] sm:$0xff]
  %v23 = vld [vmem:[%s0 + $0x78] sm:$0xff]
  %v24 = vld [vmem:[%s0 + $0x80] sm:$0xff]
  %v25 = vld [vmem:[%s0 + $0x88] sm:$0xff]
  %v26 = vld [vmem:[%s0 + $0x90] sm:$0xff]
  %v27 = vld [vmem:[%s0 + $0x98] sm:$0xff]
  %v28 = vld [vmem:[%s0 + $0xa0] sm:$0xff]
  %v29 = vld [vmem:[%s0 + $0xa8] sm:$0xff]
  %v30 = vld [vmem:[%s0 + $0xb0] sm:$0xff]
  %v31 = vld [vmem:[%s0 + $0xb8] sm:$0xff]
  %v32 = vld [vmem:[%s0 + $0xc0] sm:$0xff]
  %v33 = vld [vmem:[%s0 + $0xc8] sm:$0xff]
  %v34 = vld [vmem:[%s0 + $0xd0] sm:$0xff]
  %v35 = vld [vmem:[%s0 + $0xd8] sm:$0xff]
  %v36 = vld [vmem:[%s0 + $0xe0] sm:$0xff]
  %v37 = vld [vmem:[%s0 + $0xe8] sm:$0xff]
  %v38 = vld [vmem:[%s0 + $0xf0] sm:$0xff]
  %v39 = vld [vmem:[%s0 + $0xf8] sm:$0xff]
  %s40 = smul.u32 0, 10
  %v41 = vlaneseq
  %v42 = vand.u32 %v41, 127
  %v43 = vstv %s40
  %v44 = vadd.s32 %v42, %v43
  %45 = vset.pattern.permute.xlu0 0
  %46 = vperm.xlu0 %45, %v8
  %v47 = vpop.permute.xlu0 %46
  %48 = vset.pattern.permute.xlu0 0
  %49 = vperm.xlu0 %48, %v9
  %v50 = vpop.permute.xlu0 %49
  %51 = vset.pattern.permute.xlu0 0
  %52 = vperm.xlu0 %51, %v10
  %v53 = vpop.permute.xlu0 %52
  %54 = vset.pattern.permute.xlu0 0
  %55 = vperm.xlu0 %54, %v11
  %v56 = vpop.permute.xlu0 %55
  %57 = vset.pattern.permute.xlu0 0
  %58 = vperm.xlu0 %57, %v12
  %v59 = vpop.permute.xlu0 %58
  %60 = vset.pattern.permute.xlu0 0
  %61 = vperm.xlu0 %60, %v13
  %v62 = vpop.permute.xlu0 %61
  %63 = vset.pattern.permute.xlu0 0
  %64 = vperm.xlu0 %63, %v14
  %v65 = vpop.permute.xlu0 %64
  %66 = vset.pattern.permute.xlu0 0
  %67 = vperm.xlu0 %66, %v15
  %v68 = vpop.permute.xlu0 %67
  %69 = vset.pattern.permute.xlu0 0
  %70 = vperm.xlu0 %69, %v16
  %v71 = vpop.permute.xlu0 %70
  %72 = vset.pattern.permute.xlu0 0
  %73 = vperm.xlu0 %72, %v17
  %v74 = vpop.permute.xlu0 %73
  %75 = vset.pattern.permute.xlu0 0
  %76 = vperm.xlu0 %75, %v18
  %v77 = vpop.permute.xlu0 %76
  %78 = vset.pattern.permute.xlu0 0
  %79 = vperm.xlu0 %78, %v19
  %v80 = vpop.permute.xlu0 %79
  %81 = vset.pattern.permute.xlu0 0
  %82 = vperm.xlu0 %81, %v20
  %v83 = vpop.permute.xlu0 %82
  %84 = vset.pattern.permute.xlu0 0
  %85 = vperm.xlu0 %84, %v21
  %v86 = vpop.permute.xlu0 %85
  %87 = vset.pattern.permute.xlu0 0
  %88 = vperm.xlu0 %87, %v22
  %v89 = vpop.permute.xlu0 %88
  %90 = vset.pattern.permute.xlu0 0
  %91 = vperm.xlu0 %90, %v23
  %v92 = vpop.permute.xlu0 %91
  %93 = vset.pattern.permute.xlu0 0
  %94 = vperm.xlu0 %93, %v24
  %v95 = vpop.permute.xlu0 %94
  %96 = vset.pattern.permute.xlu0 0
  %97 = vperm.xlu0 %96, %v25
  %v98 = vpop.permute.xlu0 %97
  %99 = vset.pattern.permute.xlu0 0
  %100 = vperm.xlu0 %99, %v26
  %v101 = vpop.permute.xlu0 %100
  %102 = vset.pattern.permute.xlu0 0
  %103 = vperm.xlu0 %102, %v27
  %v104 = vpop.permute.xlu0 %103
  %105 = vset.pattern.permute.xlu0 0
  %106 = vperm.xlu0 %105, %v28
  %v107 = vpop.permute.xlu0 %106
  %108 = vset.pattern.permute.xlu0 0
  %109 = vperm.xlu0 %108, %v29
  %v110 = vpop.permute.xlu0 %109
  %111 = vset.pattern.permute.xlu0 0
  %112 = vperm.xlu0 %111, %v30
  %v113 = vpop.permute.xlu0 %112
  %114 = vset.pattern.permute.xlu0 0
  %115 = vperm.xlu0 %114, %v31
  %v116 = vpop.permute.xlu0 %115
  %117 = vset.pattern.permute.xlu0 0
  %118 = vperm.xlu0 %117, %v32
  %v119 = vpop.permute.xlu0 %118
  %120 = vset.pattern.permute.xlu0 0
  %121 = vperm.xlu0 %120, %v33
  %v122 = vpop.permute.xlu0 %121
  %123 = vset.pattern.permute.xlu0 0
  %124 = vperm.xlu0 %123, %v34
  %v125 = vpop.permute.xlu0 %124
  %126 = vset.pattern.permute.xlu0 0
  %127 = vperm.xlu0 %126, %v35
  %v128 = vpop.permute.xlu0 %127
  %129 = vset.pattern.permute.xlu0 0
  %130 = vperm.xlu0 %129, %v36
  %v131 = vpop.permute.xlu0 %130
  %132 = vset.pattern.permute.xlu0 0
  %133 = vperm.xlu0 %132, %v37
  %v134 = vpop.permute.xlu0 %133
  %135 = vset.pattern.permute.xlu0 0
  %136 = vperm.xlu0 %135, %v38
  %v137 = vpop.permute.xlu0 %136
  %138 = vset.pattern.permute.xlu0 0
  %139 = vperm.xlu0 %138, %v39
  %v140 = vpop.permute.xlu0 %139
  %vm141 = vcmp.eq.s32.totalorder %v44, %v47
  %vm142 = vcmp.eq.s32.totalorder %v44, %v50
  %vm143 = vcmp.eq.s32.totalorder %v44, %v53
  %vm144 = vcmp.eq.s32.totalorder %v44, %v56
  %vm145 = vcmp.eq.s32.totalorder %v44, %v59
  %vm146 = vcmp.eq.s32.totalorder %v44, %v62
  %vm147 = vcmp.eq.s32.totalorder %v44, %v65
  %vm148 = vcmp.eq.s32.totalorder %v44, %v68
  %vm149 = vcmp.eq.s32.totalorder %v44, %v71
  %vm150 = vcmp.eq.s32.totalorder %v44, %v74
  %vm151 = vcmp.eq.s32.totalorder %v44, %v77
  %vm152 = vcmp.eq.s32.totalorder %v44, %v80
  %vm153 = vcmp.eq.s32.totalorder %v44, %v83
  %vm154 = vcmp.eq.s32.totalorder %v44, %v86
  %vm155 = vcmp.eq.s32.totalorder %v44, %v89
  %vm156 = vcmp.eq.s32.totalorder %v44, %v92
  %vm157 = vcmp.eq.s32.totalorder %v44, %v95
  %vm158 = vcmp.eq.s32.totalorder %v44, %v98
  %vm159 = vcmp.eq.s32.totalorder %v44, %v101
  %vm160 = vcmp.eq.s32.totalorder %v44, %v104
  %vm161 = vcmp.eq.s32.totalorder %v44, %v107
  %vm162 = vcmp.eq.s32.totalorder %v44, %v110
  %vm163 = vcmp.eq.s32.totalorder %v44, %v113
  %vm164 = vcmp.eq.s32.totalorder %v44, %v116
  %vm165 = vcmp.eq.s32.totalorder %v44, %v119
  %vm166 = vcmp.eq.s32.totalorder %v44, %v122
  %vm167 = vcmp.eq.s32.totalorder %v44, %v125
  %vm168 = vcmp.eq.s32.totalorder %v44, %v128
  %vm169 = vcmp.eq.s32.totalorder %v44, %v131
  %vm170 = vcmp.eq.s32.totalorder %v44, %v134
  %vm171 = vcmp.eq.s32.totalorder %v44, %v137
  %vm172 = vcmp.eq.s32.totalorder %v44, %v140
  %v173 = vsel %vm141, 1, 0
  %v174 = vsel %vm142, 1, 0
  %v175 = vsel %vm143, 1, 0
  %v176 = vsel %vm144, 1, 0
  %v177 = vsel %vm145, 1, 0
  %v178 = vsel %vm146, 1, 0
  %v179 = vsel %vm147, 1, 0
  %v180 = vsel %vm148, 1, 0
  %v181 = vsel %vm149, 1, 0
  %v182 = vsel %vm150, 1, 0
  %v183 = vsel %vm151, 1, 0
  %v184 = vsel %vm152, 1, 0
  %v185 = vsel %vm153, 1, 0
  %v186 = vsel %vm154, 1, 0
  %v187 = vsel %vm155, 1, 0
  %v188 = vsel %vm156, 1, 0
  %v189 = vsel %vm157, 1, 0
  %v190 = vsel %vm158, 1, 0
  %v191 = vsel %vm159, 1, 0
  %v192 = vsel %vm160, 1, 0
  %v193 = vsel %vm161, 1, 0
  %v194 = vsel %vm162, 1, 0
  %v195 = vsel %vm163, 1, 0
  %v196 = vsel %vm164, 1, 0
  %v197 = vsel %vm165, 1, 0
  %v198 = vsel %vm166, 1, 0
  %v199 = vsel %vm167, 1, 0
  %v200 = vsel %vm168, 1, 0
  %v201 = vsel %vm169, 1, 0
  %v202 = vsel %vm170, 1, 0
  %v203 = vsel %vm171, 1, 0
  %v204 = vsel %vm172, 1, 0
  %v205 = vcvt.s32.f32 %v173
  %v206 = vcvt.s32.f32 %v174
  %v207 = vcvt.s32.f32 %v175
  %v208 = vcvt.s32.f32 %v176
  %v209 = vcvt.s32.f32 %v177
  %v210 = vcvt.s32.f32 %v178
  %v211 = vcvt.s32.f32 %v179
  %v212 = vcvt.s32.f32 %v180
  %v213 = vcvt.s32.f32 %v181
  %v214 = vcvt.s32.f32 %v182
  %v215 = vcvt.s32.f32 %v183
  %v216 = vcvt.s32.f32 %v184
  %v217 = vcvt.s32.f32 %v185
  %v218 = vcvt.s32.f32 %v186
  %v219 = vcvt.s32.f32 %v187
  %v220 = vcvt.s32.f32 %v188
  %v221 = vcvt.s32.f32 %v189
  %v222 = vcvt.s32.f32 %v190
  %v223 = vcvt.s32.f32 %v191
  %v224 = vcvt.s32.f32 %v192
  %v225 = vcvt.s32.f32 %v193
  %v226 = vcvt.s32.f32 %v194
  %v227 = vcvt.s32.f32 %v195
  %v228 = vcvt.s32.f32 %v196
  %v229 = vcvt.s32.f32 %v197
  %v230 = vcvt.s32.f32 %v198
  %v231 = vcvt.s32.f32 %v199
  %v232 = vcvt.s32.f32 %v200
  %v233 = vcvt.s32.f32 %v201
  %v234 = vcvt.s32.f32 %v202
  %v235 = vcvt.s32.f32 %v203
  %v236 = vcvt.s32.f32 %v204
  %vm237 = vcmask 80896
  %238 = vst.msk [vmem:[%s1] sm:$0xff] %vm237, %v205
  %239 = vst.msk [vmem:[%s1 + $0x8] sm:$0xff] %vm237, %v206
  %240 = vst.msk [vmem:[%s1 + $0x10] sm:$0xff] %vm237, %v207
  %241 = vst.msk [vmem:[%s1 + $0x18] sm:$0xff] %vm237, %v208
  %242 = vst.msk [vmem:[%s1 + $0x20] sm:$0xff] %vm237, %v209
  %243 = vst.msk [vmem:[%s1 + $0x28] sm:$0xff] %vm237, %v210
  %244 = vst.msk [vmem:[%s1 + $0x30] sm:$0xff] %vm237, %v211
  %245 = vst.msk [vmem:[%s1 + $0x38] sm:$0xff] %vm237, %v212
  %246 = vst.msk [vmem:[%s1 + $0x40] sm:$0xff] %vm237, %v213
  %247 = vst.msk [vmem:[%s1 + $0x48] sm:$0xff] %vm237, %v214
  %248 = vst.msk [vmem:[%s1 + $0x50] sm:$0xff] %vm237, %v215
  %249 = vst.msk [vmem:[%s1 + $0x58] sm:$0xff] %vm237, %v216
  %250 = vst.msk [vmem:[%s1 + $0x60] sm:$0xff] %vm237, %v217
  %251 = vst.msk [vmem:[%s1 + $0x68] sm:$0xff] %vm237, %v218
  %252 = vst.msk [vmem:[%s1 + $0x70] sm:$0xff] %vm237, %v219
  %253 = vst.msk [vmem:[%s1 + $0x78] sm:$0xff] %vm237, %v220
  %254 = vst.msk [vmem:[%s1 + $0x80] sm:$0xff] %vm237, %v221
  %255 = vst.msk [vmem:[%s1 + $0x88] sm:$0xff] %vm237, %v222
  %256 = vst.msk [vmem:[%s1 + $0x90] sm:$0xff] %vm237, %v223
  %257 = vst.msk [vmem:[%s1 + $0x98] sm:$0xff] %vm237, %v224
  %258 = vst.msk [vmem:[%s1 + $0xa0] sm:$0xff] %vm237, %v225
  %259 = vst.msk [vmem:[%s1 + $0xa8] sm:$0xff] %vm237, %v226
  %260 = vst.msk [vmem:[%s1 + $0xb0] sm:$0xff] %vm237, %v227
  %261 = vst.msk [vmem:[%s1 + $0xb8] sm:$0xff] %vm237, %v228
  %262 = vst.msk [vmem:[%s1 + $0xc0] sm:$0xff] %vm237, %v229
  %263 = vst.msk [vmem:[%s1 + $0xc8] sm:$0xff] %vm237, %v230
  %264 = vst.msk [vmem:[%s1 + $0xd0] sm:$0xff] %vm237, %v231
  %265 = vst.msk [vmem:[%s1 + $0xd8] sm:$0xff] %vm237, %v232
  %266 = vst.msk [vmem:[%s1 + $0xe0] sm:$0xff] %vm237, %v233
  %267 = vst.msk [vmem:[%s1 + $0xe8] sm:$0xff] %vm237, %v234
  %268 = vst.msk [vmem:[%s1 + $0xf0] sm:$0xff] %vm237, %v235
  %269 = vst.msk [vmem:[%s1 + $0xf8] sm:$0xff] %vm237, %v236
  // Predicated region
  $region6: #{tpu_custom_call.1} parent=0 // pred_check
    _
  $region7: #{tpu_custom_call.1} parent=0 // pred_check_branch
    %271 = sbr.rel (0) target = $region9
  $region8: #{tpu_custom_call.1} parent=0 // pred_region
    _
  $region9: #{tpu_custom_call.1} parent=0 // pred_fallthru
    _
  // Predicated region
  $region10: #{tpu_custom_call.1} parent=0 // pred_check
    _
  $region11: #{tpu_custom_call.1} parent=0 // pred_check_branch
    %273 = sbr.rel (0) target = $region13
  $region12: #{tpu_custom_call.1} parent=0 // pred_region
    _
  $region13: #{tpu_custom_call.1} parent=0 // pred_fallthru
    _

</llo_original>
